<compile_context>
chip_gen: v7x
topology: tpu7x:2x2x1
jax: 0.10.0
libtpu: 0.0.40
codegen_flags: <defaults>
</compile_context>

<pallas_src>
import jax
import jax.numpy as jnp
from jax.experimental import pallas as pl
from jax.experimental.pallas import tpu as pltpu

SUBLANE_F32 = 8    # f32 sublane alignment for the second-to-last block dim
SUBLANE_BF16 = 16  # bf16 packs (16, 128) per vreg


def _round_up(n, m):
    return (n + m - 1) // m * m


def _make_kernel(n_layers, compute_dtype, half):
    """n_layers-deep MLP with LeakyReLU(0.2) between layers, gamma/beta split."""

    def kernel(*refs):
        x_ref = refs[0]
        gamma_ref, beta_ref = refs[-2], refs[-1]
        h = x_ref[...]                              # [tb, dim_in], operand dtype
        for li in range(n_layers):
            w = refs[1 + 2 * li][...]               # [fin, fout], compute_dtype
            b = refs[2 + 2 * li][...]               # [1, fout],  f32
            # MXU matmul in compute_dtype with f32 accumulation; bias add and
            # LeakyReLU stay f32 (v5e has no bf16 VPU; negligible elsewhere).
            z = jnp.dot(h.astype(compute_dtype), w,
                        preferred_element_type=jnp.float32) + b
            if li < n_layers - 1:
                z = jnp.where(z >= 0, z, 0.2 * z)   # LeakyReLU(0.2)
            h = z
        # Direct gamma/beta stores: no padded output, no wrapper slice copies.
        gamma_ref[...] = h[:, :half].astype(gamma_ref.dtype)
        beta_ref[...] = h[:, half:].astype(beta_ref.dtype)

    return kernel


def prepare_params(params, compute_dtype=jnp.float32):
    """Cast weights to the MXU operand dtype once (hoisted out of per-call path).

    params: list of (W [fan_in, fan_out] f32, b [1, fan_out] f32).
    """
    return [(jnp.asarray(w, compute_dtype), jnp.asarray(b, jnp.float32))
            for w, b in params]


def pigan_mapping_network(x, prepared_params, *, batch_tile=1024):
    """x: [B, dim_in].  prepared_params: output of prepare_params.

    Returns (gamma, beta), each [B, dim_out // 2] f32.
    """
    B, dim_in = x.shape
    n_layers = len(prepared_params)
    dim_out = prepared_params[-1][0].shape[1]
    assert dim_out % 2 == 0, "gamma/beta split requires even dim_out"
    half = dim_out // 2

    compute_dtype = prepared_params[0][0].dtype
    is_bf16 = compute_dtype == jnp.bfloat16
    row_align = SUBLANE_BF16 if is_bf16 else SUBLANE_F32

    # Pad the batch only to the sublane alignment (<= 15 rows), never to a tile
    # multiple, and ship x in the MXU operand dtype (halves input DMA for bf16).
    b_al = _round_up(B, row_align)
    x_in = x.astype(compute_dtype)
    if b_al != B:
        x_in = jnp.pad(x_in, ((0, b_al - B), (0, 0)))

    # Batch tile: big (amortize ~0.35 us/step pipeline overhead), aligned, and
    # split so v7x's two TensorCores both get work whenever the batch allows.
    tb = min(_round_up(batch_tile, row_align), b_al)
    if tb >= b_al and b_al >= 2 * row_align:
        tb = _round_up((b_al + 1) // 2, row_align)
    grid = (pl.cdiv(b_al, tb),)

    # --- specs ---------------------------------------------------------------
    flat_args = [x_in]
    in_specs = [pl.BlockSpec((tb, dim_in), lambda i: (i, 0))]
    for w, b in prepared_params:
        flat_args.extend([w, b])
        # Constant index_maps -> weights/biases stay VMEM-resident (one DMA).
        in_specs.append(pl.BlockSpec(w.shape, lambda i: (0, 0)))
        in_specs.append(pl.BlockSpec(b.shape, lambda i: (0, 0)))

    out_shape = (jax.ShapeDtypeStruct((b_al, half), jnp.float32),
                 jax.ShapeDtypeStruct((b_al, half), jnp.float32))
    out_specs = (pl.BlockSpec((tb, half), lambda i: (i, 0)),
                 pl.BlockSpec((tb, half), lambda i: (i, 0)))

    # --- cost hint from true (unpadded) dims ---------------------------------
    flops = 2 * B * sum(w.shape[0] * w.shape[1] for w, _ in prepared_params)
    bytes_accessed = (
        B * dim_in * jnp.dtype(compute_dtype).itemsize
        + sum(w.size * w.dtype.itemsize + b.size * 4 for w, b in prepared_params)
        + B * dim_out * 4)
    cost = pl.CostEstimate(flops=flops, transcendentals=0,
                           bytes_accessed=bytes_accessed)

    kernel = _make_kernel(n_layers, compute_dtype, half)
    gamma, beta = pl.pallas_call(
        kernel,
        out_shape=out_shape,
        grid=grid,
        in_specs=in_specs,
        out_specs=out_specs,
        compiler_params=pltpu.CompilerParams(
            dimension_semantics=("parallel",)),   # megacore sharding on v7x
        cost_estimate=cost,
    )(*flat_args)

    if b_al != B:   # tiny (<16-row) crop; no-op for aligned batches
        gamma, beta = gamma[:B], beta[:B]
    return gamma, beta


# ----------------------------------------------------------------------------
# Parameter init + pure-JAX reference (mirrors the PyTorch module).
# ----------------------------------------------------------------------------
def init_params(key, dim_in, dim_hidden, dim_out, depth=3):
    a = 0.2
    gain = (2.0 / (1.0 + a * a)) ** 0.5  # kaiming gain for leaky_relu

    if depth == 0:
        dims = [(dim_in, dim_out)]
    else:
        dims = [(dim_in, dim_hidden)]
        for _ in range(depth - 1):
            dims.append((dim_hidden, dim_hidden))
        dims.append((dim_hidden, dim_out))

    params = []
    for i, (fan_in, fan_out) in enumerate(dims):
        key, kw, kb = jax.random.split(key, 3)
        std = gain / (fan_in ** 0.5)
        w = std * jax.random.normal(kw, (fan_in, fan_out), dtype=jnp.float32)
        bound = 1.0 / (fan_in ** 0.5)
        b = jax.random.uniform(kb, (1, fan_out), minval=-bound, maxval=bound,
                               dtype=jnp.float32)
        if i == len(dims) - 1:
            w = w * 0.25  # `self.net[-1].weight *= 0.25`
        params.append((w, b))
    return params


def reference_forward(x, params):
    h = x
    for i, (w, b) in enumerate(params):
        h = h @ w + b
        if i < len(params) - 1:
            h = jnp.where(h >= 0, h, 0.2 * h)
    half = h.shape[-1] // 2
    return h[:, :half], h[:, half:]


if __name__ == "__main__":
    key = jax.random.PRNGKey(0)
    B, dim_in, dim_hidden, dim_out, depth = 8, 32, 64, 64, 3

    key, kx = jax.random.split(key)
    x = jax.random.normal(kx, (B, dim_in), dtype=jnp.float32)
    params = init_params(key, dim_in, dim_hidden, dim_out, depth)

    g_ref, b_ref = reference_forward(x, params)

    # f32 path: exact semantics of the PyTorch module.
    prepped_f32 = prepare_params(params, jnp.float32)
    gamma, beta = pigan_mapping_network(x, prepped_f32)
    gamma = jax.block_until_ready(gamma)
    beta = jax.block_until_ready(beta)
    assert gamma.shape == (B, dim_out // 2) and beta.shape == (B, dim_out // 2)
    assert jnp.allclose(gamma, g_ref, atol=1e-5, rtol=1e-5)
    assert jnp.allclose(beta, b_ref, atol=1e-5, rtol=1e-5)

    # bf16-operand path (f32 accumulation): recommended on v5e, halves DMA everywhere.
    prepped_bf16 = prepare_params(params, jnp.bfloat16)
    gamma16, beta16 = pigan_mapping_network(x, prepped_bf16)
    gamma16 = jax.block_until_ready(gamma16)
    beta16 = jax.block_until_ready(beta16)
    assert gamma16.shape == (B, dim_out // 2) and beta16.shape == (B, dim_out // 2)
    assert jnp.allclose(gamma16, g_ref, atol=5e-2, rtol=5e-2)
    assert jnp.allclose(beta16, b_ref, atol=5e-2, rtol=5e-2)

    print("KERNEL_OK")
</pallas_src>

<mosaic_0001>
module attributes {stable_mosaic.version = 11 : i64} {
  func.func @kernel(%arg0: i32, %arg1: memref<8x32xf32, #tpu.memory_space<vmem>>, %arg2: memref<32x64xf32, #tpu.memory_space<vmem>>, %arg3: memref<1x64xf32, #tpu.memory_space<vmem>>, %arg4: memref<64x64xf32, #tpu.memory_space<vmem>>, %arg5: memref<1x64xf32, #tpu.memory_space<vmem>>, %arg6: memref<64x64xf32, #tpu.memory_space<vmem>>, %arg7: memref<1x64xf32, #tpu.memory_space<vmem>>, %arg8: memref<64x64xf32, #tpu.memory_space<vmem>>, %arg9: memref<1x64xf32, #tpu.memory_space<vmem>>, %arg10: memref<8x32xf32, #tpu.memory_space<vmem>>, %arg11: memref<8x32xf32, #tpu.memory_space<vmem>>) attributes {dimension_semantics = [#tpu.dimension_semantics<parallel>], iteration_bounds = array<i64: 1>, scalar_prefetch = 0 : i64, scratch_operands = 0 : i64, tpu.core_type = #tpu.core_type<tc>, window_params = [{transform_indices = @transform_0, window_bounds = array<i64: 8, 32>}, {pipeline_mode = #tpu.pipeline_mode<synchronous>, transform_indices = @transform_1, window_bounds = array<i64: 32, 64>}, {pipeline_mode = #tpu.pipeline_mode<synchronous>, transform_indices = @transform_2, window_bounds = array<i64: 1, 64>}, {pipeline_mode = #tpu.pipeline_mode<synchronous>, transform_indices = @transform_3, window_bounds = array<i64: 64, 64>}, {pipeline_mode = #tpu.pipeline_mode<synchronous>, transform_indices = @transform_4, window_bounds = array<i64: 1, 64>}, {pipeline_mode = #tpu.pipeline_mode<synchronous>, transform_indices = @transform_5, window_bounds = array<i64: 64, 64>}, {pipeline_mode = #tpu.pipeline_mode<synchronous>, transform_indices = @transform_6, window_bounds = array<i64: 1, 64>}, {pipeline_mode = #tpu.pipeline_mode<synchronous>, transform_indices = @transform_7, window_bounds = array<i64: 64, 64>}, {pipeline_mode = #tpu.pipeline_mode<synchronous>, transform_indices = @transform_8, window_bounds = array<i64: 1, 64>}, {transform_indices = @transform_9, window_bounds = array<i64: 8, 32>}, {transform_indices = @transform_10, window_bounds = array<i64: 8, 32>}]} {
    %c0 = arith.constant 0 : index
    %c0_0 = arith.constant 0 : index
    %0 = vector.load %arg1[%c0, %c0_0] : memref<8x32xf32, #tpu.memory_space<vmem>>, vector<8x32xf32>
    %c0_1 = arith.constant 0 : index
    %c0_2 = arith.constant 0 : index
    %1 = vector.load %arg2[%c0_1, %c0_2] : memref<32x64xf32, #tpu.memory_space<vmem>>, vector<32x64xf32>
    %c0_3 = arith.constant 0 : index
    %c0_4 = arith.constant 0 : index
    %2 = vector.load %arg3[%c0_3, %c0_4] : memref<1x64xf32, #tpu.memory_space<vmem>>, vector<1x64xf32>
    %cst = arith.constant dense<0.000000e+00> : vector<8x64xf32>
    %3 = tpu.matmul %0, %1, %cst {dimension_numbers = #tpu.dot_dimension_numbers<[1], [0], [0], [1], [0, 0, 1, 1], [], []>} : vector<8x32xf32>, vector<32x64xf32>, vector<8x64xf32> -> vector<8x64xf32>
    %4 = vector.broadcast %2 : vector<1x64xf32> to vector<8x64xf32>
    %5 = arith.addf %3, %4 : vector<8x64xf32>
    %cst_5 = arith.constant 0.000000e+00 : f32
    %6 = vector.broadcast %cst_5 : f32 to vector<8x64xf32>
    %7 = arith.cmpf oge, %5, %6 : vector<8x64xf32>
    %cst_6 = arith.constant 2.000000e-01 : f32
    %8 = vector.broadcast %cst_6 : f32 to vector<8x64xf32>
    %9 = arith.mulf %8, %5 : vector<8x64xf32>
    %10 = arith.select %7, %5, %9 : vector<8x64xi1>, vector<8x64xf32>
    %c0_7 = arith.constant 0 : index
    %c0_8 = arith.constant 0 : index
    %11 = vector.load %arg4[%c0_7, %c0_8] : memref<64x64xf32, #tpu.memory_space<vmem>>, vector<64x64xf32>
    %c0_9 = arith.constant 0 : index
    %c0_10 = arith.constant 0 : index
    %12 = vector.load %arg5[%c0_9, %c0_10] : memref<1x64xf32, #tpu.memory_space<vmem>>, vector<1x64xf32>
    %cst_11 = arith.constant dense<0.000000e+00> : vector<8x64xf32>
    %13 = tpu.matmul %10, %11, %cst_11 {dimension_numbers = #tpu.dot_dimension_numbers<[1], [0], [0], [1], [0, 0, 1, 1], [], []>} : vector<8x64xf32>, vector<64x64xf32>, vector<8x64xf32> -> vector<8x64xf32>
    %14 = vector.broadcast %12 : vector<1x64xf32> to vector<8x64xf32>
    %15 = arith.addf %13, %14 : vector<8x64xf32>
    %cst_12 = arith.constant 0.000000e+00 : f32
    %16 = vector.broadcast %cst_12 : f32 to vector<8x64xf32>
    %17 = arith.cmpf oge, %15, %16 : vector<8x64xf32>
    %cst_13 = arith.constant 2.000000e-01 : f32
    %18 = vector.broadcast %cst_13 : f32 to vector<8x64xf32>
    %19 = arith.mulf %18, %15 : vector<8x64xf32>
    %20 = arith.select %17, %15, %19 : vector<8x64xi1>, vector<8x64xf32>
    %c0_14 = arith.constant 0 : index
    %c0_15 = arith.constant 0 : index
    %21 = vector.load %arg6[%c0_14, %c0_15] : memref<64x64xf32, #tpu.memory_space<vmem>>, vector<64x64xf32>
    %c0_16 = arith.constant 0 : index
    %c0_17 = arith.constant 0 : index
    %22 = vector.load %arg7[%c0_16, %c0_17] : memref<1x64xf32, #tpu.memory_space<vmem>>, vector<1x64xf32>
    %cst_18 = arith.constant dense<0.000000e+00> : vector<8x64xf32>
    %23 = tpu.matmul %20, %21, %cst_18 {dimension_numbers = #tpu.dot_dimension_numbers<[1], [0], [0], [1], [0, 0, 1, 1], [], []>} : vector<8x64xf32>, vector<64x64xf32>, vector<8x64xf32> -> vector<8x64xf32>
    %24 = vector.broadcast %22 : vector<1x64xf32> to vector<8x64xf32>
    %25 = arith.addf %23, %24 : vector<8x64xf32>
    %cst_19 = arith.constant 0.000000e+00 : f32
    %26 = vector.broadcast %cst_19 : f32 to vector<8x64xf32>
    %27 = arith.cmpf oge, %25, %26 : vector<8x64xf32>
    %cst_20 = arith.constant 2.000000e-01 : f32
    %28 = vector.broadcast %cst_20 : f32 to vector<8x64xf32>
    %29 = arith.mulf %28, %25 : vector<8x64xf32>
    %30 = arith.select %27, %25, %29 : vector<8x64xi1>, vector<8x64xf32>
    %c0_21 = arith.constant 0 : index
    %c0_22 = arith.constant 0 : index
    %31 = vector.load %arg8[%c0_21, %c0_22] : memref<64x64xf32, #tpu.memory_space<vmem>>, vector<64x64xf32>
    %c0_23 = arith.constant 0 : index
    %c0_24 = arith.constant 0 : index
    %32 = vector.load %arg9[%c0_23, %c0_24] : memref<1x64xf32, #tpu.memory_space<vmem>>, vector<1x64xf32>
    %cst_25 = arith.constant dense<0.000000e+00> : vector<8x64xf32>
    %33 = tpu.matmul %30, %31, %cst_25 {dimension_numbers = #tpu.dot_dimension_numbers<[1], [0], [0], [1], [0, 0, 1, 1], [], []>} : vector<8x64xf32>, vector<64x64xf32>, vector<8x64xf32> -> vector<8x64xf32>
    %34 = vector.broadcast %32 : vector<1x64xf32> to vector<8x64xf32>
    %35 = arith.addf %33, %34 : vector<8x64xf32>
    %36 = vector.extract_strided_slice %35 {offsets = [0, 0], sizes = [8, 32], strides = [1, 1]} : vector<8x64xf32> to vector<8x32xf32>
    %c0_26 = arith.constant 0 : index
    %c0_27 = arith.constant 0 : index
    %37 = vector.load %arg10[%c0_26, %c0_27] : memref<8x32xf32, #tpu.memory_space<vmem>>, vector<8x32xf32>
    tpu.vector_store %arg10[%c0_26, %c0_27], %36 {strides = array<i32>} : memref<8x32xf32, #tpu.memory_space<vmem>>, vector<8x32xf32>,
    %38 = vector.extract_strided_slice %35 {offsets = [0, 32], sizes = [8, 32], strides = [1, 1]} : vector<8x64xf32> to vector<8x32xf32>
    %c0_28 = arith.constant 0 : index
    %c0_29 = arith.constant 0 : index
    %39 = vector.load %arg11[%c0_28, %c0_29] : memref<8x32xf32, #tpu.memory_space<vmem>>, vector<8x32xf32>
    tpu.vector_store %arg11[%c0_28, %c0_29], %38 {strides = array<i32>} : memref<8x32xf32, #tpu.memory_space<vmem>>, vector<8x32xf32>,
    return
  }
  func.func @transform_0(%arg0: i32) -> (i32, i32) {
    %c0_i32 = arith.constant 0 : i32
    %c0_i32_0 = arith.constant 0 : i32
    return %arg0, %c0_i32 : i32, i32
  }
  func.func @transform_1(%arg0: i32) -> (i32, i32) {
    %c0_i32 = arith.constant 0 : i32
    %c0_i32_0 = arith.constant 0 : i32
    %c0_i32_1 = arith.constant 0 : i32
    return %c0_i32, %c0_i32_0 : i32, i32
  }
  func.func @transform_2(%arg0: i32) -> (i32, i32) {
    %c0_i32 = arith.constant 0 : i32
    %c0_i32_0 = arith.constant 0 : i32
    %c0_i32_1 = arith.constant 0 : i32
    return %c0_i32, %c0_i32_0 : i32, i32
  }
  func.func @transform_3(%arg0: i32) -> (i32, i32) {
    %c0_i32 = arith.constant 0 : i32
    %c0_i32_0 = arith.constant 0 : i32
    %c0_i32_1 = arith.constant 0 : i32
    return %c0_i32, %c0_i32_0 : i32, i32
  }
  func.func @transform_4(%arg0: i32) -> (i32, i32) {
    %c0_i32 = arith.constant 0 : i32
    %c0_i32_0 = arith.constant 0 : i32
    %c0_i32_1 = arith.constant 0 : i32
    return %c0_i32, %c0_i32_0 : i32, i32
  }
  func.func @transform_5(%arg0: i32) -> (i32, i32) {
    %c0_i32 = arith.constant 0 : i32
    %c0_i32_0 = arith.constant 0 : i32
    %c0_i32_1 = arith.constant 0 : i32
    return %c0_i32, %c0_i32_0 : i32, i32
  }
  func.func @transform_6(%arg0: i32) -> (i32, i32) {
    %c0_i32 = arith.constant 0 : i32
    %c0_i32_0 = arith.constant 0 : i32
    %c0_i32_1 = arith.constant 0 : i32
    return %c0_i32, %c0_i32_0 : i32, i32
  }
  func.func @transform_7(%arg0: i32) -> (i32, i32) {
    %c0_i32 = arith.constant 0 : i32
    %c0_i32_0 = arith.constant 0 : i32
    %c0_i32_1 = arith.constant 0 : i32
    return %c0_i32, %c0_i32_0 : i32, i32
  }
  func.func @transform_8(%arg0: i32) -> (i32, i32) {
    %c0_i32 = arith.constant 0 : i32
    %c0_i32_0 = arith.constant 0 : i32
    %c0_i32_1 = arith.constant 0 : i32
    return %c0_i32, %c0_i32_0 : i32, i32
  }
  func.func @transform_9(%arg0: i32) -> (i32, i32) {
    %c0_i32 = arith.constant 0 : i32
    %c0_i32_0 = arith.constant 0 : i32
    return %arg0, %c0_i32 : i32, i32
  }
  func.func @transform_10(%arg0: i32) -> (i32, i32) {
    %c0_i32 = arith.constant 0 : i32
    %c0_i32_0 = arith.constant 0 : i32
    return %arg0, %c0_i32 : i32, i32
  }
}

</mosaic_0001>

<llo_original>
// kernel: tpu_custom_call.1
$region0: #{tpu_custom_call.1}
  #allocation0 [shape = 'u32[]', space=smem, size = 0x4, offset = 0x4, fixed_abs, tag = 'smem constant byte address 0x4 - core index']
  #allocation1 [shape = 'u32[144,128]{1,0:T(1,128)}', space=vmem, size = 0x12000, scoped, tag = 'internal scratch']
  %s0 = inlined_call_operand.hbm [shape: f32[8,32], index: 0, kind: input, shape index: {}]
  %s1 = inlined_call_operand.hbm [shape: f32[32,64], index: 1, kind: input, shape index: {}]
  %s2 = inlined_call_operand.vmem [shape: f32[1,64], index: 2, kind: input, shape index: {}]
  %s3 = inlined_call_operand.hbm [shape: f32[64,64], index: 3, kind: input, shape index: {}]
  %s4 = inlined_call_operand.vmem [shape: f32[1,64], index: 4, kind: input, shape index: {}]
  %s5 = inlined_call_operand.hbm [shape: f32[64,64], index: 5, kind: input, shape index: {}]
  %s6 = inlined_call_operand.vmem [shape: f32[1,64], index: 6, kind: input, shape index: {}]
  %s7 = inlined_call_operand.hbm [shape: f32[64,64], index: 7, kind: input, shape index: {}]
  %s8 = inlined_call_operand.vmem [shape: f32[1,64], index: 8, kind: input, shape index: {}]
  %s9 = inlined_call_operand.hbm [shape: f32[8,32], index: 9, kind: output, shape index: {0}]
  %s10 = inlined_call_operand.hbm [shape: f32[8,32], index: 10, kind: output, shape index: {1}]
  %11 = xla_tuple %s9, %s10
  %s12 = sld [smem:[#allocation0]]
  $region74: #{tpu_custom_call.1} parent=0
    _
  %s14 = ssub.s32 1, %s12
  %s15 = scalar_select 0, %s14, %s12
  $region1: #{tpu_custom_call.1} parent=0
    #allocation2 [shape = 'u8[4096]{0}', space=vmem, size = 0x1000, scoped, tag = 'input window, operand 0, single buffered']
    #allocation3 [shape = 's32[1]{0}', space=sflag, size = 0x4, scoped, tag = 'scoped memory for tpu_custom_call.1']
    #allocation4 [shape = 's32[1]{0}', space=sflag, size = 0x4, scoped, tag = 'scoped memory for tpu_custom_call.1']
    #allocation5 [shape = 'u8[16384]{0}', space=vmem, size = 0x4000, scoped, tag = 'input window, operand 1, single buffered']
    #allocation6 [shape = 's32[1]{0}', space=sflag, size = 0x4, scoped, tag = 'scoped memory for tpu_custom_call.1']
    #allocation7 [shape = 'u8[32768]{0}', space=vmem, size = 0x8000, scoped, tag = 'input window, operand 3, single buffered']
    #allocation8 [shape = 'u8[32768]{0}', space=vmem, size = 0x8000, scoped, tag = 'input window, operand 5, single buffered']
    #allocation9 [shape = 's32[1]{0}', space=sflag, size = 0x4, scoped, tag = 'scoped memory for tpu_custom_call.1']
    #allocation10 [shape = 'u8[32768]{0}', space=vmem, size = 0x8000, scoped, tag = 'input window, operand 7, single buffered']
    #allocation11 [shape = 'u8[4096]{0}', space=vmem, size = 0x1000, scoped, tag = 'output window, operand 0, single buffered']
    #allocation12 [shape = 'u8[4096]{0}', space=vmem, size = 0x1000, scoped, tag = 'output window, operand 1, single buffered']
    #allocation13 [shape = 's32[1]{0}', space=sflag, size = 0x4, scoped, tag = 'scoped memory for tpu_custom_call.1']
    %16 = vsyncpa [#allocation3], 0
    %17 = vsyncpa [#allocation6], 0
    %18 = vsyncpa [#allocation9], 0
    %19 = vsyncpa [#allocation4], 0
    %20 = vsyncpa [#allocation13], 0
    // Predicated region
    $region2: #{tpu_custom_call.1} parent=1 // pred_check
      _
    $region3: #{tpu_custom_call.1} parent=1 // pred_check_branch
      %22 = sbr.rel (0) target = $region5
    $region4: #{tpu_custom_call.1} parent=1 // pred_region
      %s24 = ssub.s32 128, 128
      %25 = vsyncadd [#allocation3], %s24
      %s27 = sshll.u32 [#allocation2], 4
      %s28 = int_to_ptr.vmem [resolvable:$true] %s27
      %30 = dma.hbm_to_vmem [thread:$0]  %s0, 128, %s28, [#allocation3]
    $region5: #{tpu_custom_call.1} parent=1 // pred_fallthru
      _
    // Predicated region
    $region6: #{tpu_custom_call.1} parent=1 // pred_check
      _
    $region7: #{tpu_custom_call.1} parent=1 // pred_check_branch
      %32 = sbr.rel (0) target = $region9
    $region8: #{tpu_custom_call.1} parent=1 // pred_region
      %s34 = ssub.s32 512, 512
      %35 = vsyncadd [#allocation6], %s34
      %s36 = sshll.u32 [#allocation5], 4
      %s37 = int_to_ptr.vmem [resolvable:$true] %s36
      %42 = dma.hbm_to_vmem [thread:$0]  %s1, 512, %s37, [#allocation6], 128, 128, 8
    $region9: #{tpu_custom_call.1} parent=1 // pred_fallthru
      _
    // Predicated region
    $region10: #{tpu_custom_call.1} parent=1 // pred_check
      _
    $region11: #{tpu_custom_call.1} parent=1 // pred_check_branch
      %44 = sbr.rel (0) target = $region13
    $region12: #{tpu_custom_call.1} parent=1 // pred_region
      _
    $region13: #{tpu_custom_call.1} parent=1 // pred_fallthru
      _
    // Predicated region
    $region14: #{tpu_custom_call.1} parent=1 // pred_check
      _
    $region15: #{tpu_custom_call.1} parent=1 // pred_check_branch
      %46 = sbr.rel (0) target = $region17
    $region16: #{tpu_custom_call.1} parent=1 // pred_region
      %s48 = ssub.s32 1024, 1024
      %49 = vsyncadd [#allocation6], %s48
      %s50 = sshll.u32 [#allocation7], 4
      %s51 = int_to_ptr.vmem [resolvable:$true] %s50
      %56 = dma.hbm_to_vmem [thread:$0]  %s3, 1024, %s51, [#allocation6], 128, 128, 8
    $region17: #{tpu_custom_call.1} parent=1 // pred_fallthru
      _
    // Predicated region
    $region18: #{tpu_custom_call.1} parent=1 // pred_check
      _
    $region19: #{tpu_custom_call.1} parent=1 // pred_check_branch
      %58 = sbr.rel (0) target = $region21
    $region20: #{tpu_custom_call.1} parent=1 // pred_region
      _
    $region21: #{tpu_custom_call.1} parent=1 // pred_fallthru
      _
    // Predicated region
    $region22: #{tpu_custom_call.1} parent=1 // pred_check
      _
    $region23: #{tpu_custom_call.1} parent=1 // pred_check_branch
      %60 = sbr.rel (0) target = $region25
    $region24: #{tpu_custom_call.1} parent=1 // pred_region
      %s62 = ssub.s32 1024, 1024
      %63 = vsyncadd [#allocation9], %s62
      %s64 = sshll.u32 [#allocation8], 4
      %s65 = int_to_ptr.vmem [resolvable:$true] %s64
      %70 = dma.hbm_to_vmem [thread:$0]  %s5, 1024, %s65, [#allocation9], 128, 128, 8
    $region25: #{tpu_custom_call.1} parent=1 // pred_fallthru
      _
    // Predicated region
    $region26: #{tpu_custom_call.1} parent=1 // pred_check
      _
    $region27: #{tpu_custom_call.1} parent=1 // pred_check_branch
      %72 = sbr.rel (0) target = $region29
    $region28: #{tpu_custom_call.1} parent=1 // pred_region
      _
    $region29: #{tpu_custom_call.1} parent=1 // pred_fallthru
      _
    // Predicated region
    $region30: #{tpu_custom_call.1} parent=1 // pred_check
      _
    $region31: #{tpu_custom_call.1} parent=1 // pred_check_branch
      %74 = sbr.rel (0) target = $region33
    $region32: #{tpu_custom_call.1} parent=1 // pred_region
      %s76 = ssub.s32 1024, 1024
      %77 = vsyncadd [#allocation9], %s76
      %s78 = sshll.u32 [#allocation10], 4
      %s79 = int_to_ptr.vmem [resolvable:$true] %s78
      %84 = dma.hbm_to_vmem [thread:$0]  %s7, 1024, %s79, [#allocation9], 128, 128, 8
    $region33: #{tpu_custom_call.1} parent=1 // pred_fallthru
      _
    // Predicated region
    $region34: #{tpu_custom_call.1} parent=1 // pred_check
      _
    $region35: #{tpu_custom_call.1} parent=1 // pred_check_branch
      %86 = sbr.rel (0) target = $region37
    $region36: #{tpu_custom_call.1} parent=1 // pred_region
      _
    $region37: #{tpu_custom_call.1} parent=1 // pred_fallthru
      _
    // Predicated region
    $region38: #{tpu_custom_call.1} parent=1 // pred_check
      _
    $region39: #{tpu_custom_call.1} parent=1 // pred_check_branch
      %88 = sbr.rel (0) target = $region41
    $region40: #{tpu_custom_call.1} parent=1 // pred_region
      %89 = dma.done [#allocation3], 128
    $region41: #{tpu_custom_call.1} parent=1 // pred_fallthru
      _
    // Predicated region
    $region42: #{tpu_custom_call.1} parent=1 // pred_check
      _
    $region43: #{tpu_custom_call.1} parent=1 // pred_check_branch
      %91 = sbr.rel (0) target = $region45
    $region44: #{tpu_custom_call.1} parent=1 // pred_region
      %92 = dma.done [#allocation6], 512
    $region45: #{tpu_custom_call.1} parent=1 // pred_fallthru
      _
    // Predicated region
    $region46: #{tpu_custom_call.1} parent=1 // pred_check
      _
    $region47: #{tpu_custom_call.1} parent=1 // pred_check_branch
      %94 = sbr.rel (0) target = $region49
    $region48: #{tpu_custom_call.1} parent=1 // pred_region
      %95 = dma.done [#allocation6], 1024
    $region49: #{tpu_custom_call.1} parent=1 // pred_fallthru
      _
    // Predicated region
    $region50: #{tpu_custom_call.1} parent=1 // pred_check
      _
    $region51: #{tpu_custom_call.1} parent=1 // pred_check_branch
      %97 = sbr.rel (0) target = $region53
    $region52: #{tpu_custom_call.1} parent=1 // pred_region
      %98 = dma.done [#allocation9], 1024
    $region53: #{tpu_custom_call.1} parent=1 // pred_fallthru
      _
    // Predicated region
    $region54: #{tpu_custom_call.1} parent=1 // pred_check
      _
    $region55: #{tpu_custom_call.1} parent=1 // pred_check_branch
      %100 = sbr.rel (0) target = $region57
    $region56: #{tpu_custom_call.1} parent=1 // pred_region
      %101 = dma.done [#allocation9], 1024
    $region57: #{tpu_custom_call.1} parent=1 // pred_fallthru
      _
    %v102 = vld [vmem:[#allocation2] sm:$0xff]
    %v103 = vld [vmem:[#allocation5] sm:$0xff]
    %v104 = vld [vmem:[#allocation5 + $0x8] sm:$0xff]
    %v105 = vld [vmem:[#allocation5 + $0x10] sm:$0xff]
    %v106 = vld [vmem:[#allocation5 + $0x18] sm:$0xff]
    %v107 = vld [vmem:[%s2] sm:$0x1]
    %v109 = vlaneseq
    %v110 = vshrl.u32 %v109, 7
    %v111 = vsub.s32 0, %v110
    %v112 = vrot.slane %v107, %v111
    %vm114 = vcmask 261120
    %v116 = vsel %vm114, %v102, 0
    %118 = vmatprep.subr.mxu0 0.0
    %119 = vmatpush1.msra.mxu0 %v103
    %120 = vmatprep.subr.mxu0 0.0
    %121 = vmatpush1.msra.mxu0 %v104
    %122 = vmatprep.subr.mxu0 0.0
    %123 = vmatpush1.msra.mxu0 %v105
    %124 = vmatprep.subr.mxu0 0.0
    %125 = vmatpush1.msra.mxu0 %v106
    %126 = vmatprep.subr.mxu0 0.0
    %127 = vmatpush1.msra.mxu0 0.0
    %128 = vmatprep.subr.mxu0 0.0
    %129 = vmatpush1.msra.mxu0 0.0
    %130 = vmatprep.subr.mxu0 0.0
    %131 = vmatpush1.msra.mxu0 0.0
    %132 = vmatprep.subr.mxu0 0.0
    %133 = vmatpush1.msra.mxu0 0.0
    %134 = vmatprep.subr.mxu0 0.0
    %135 = vmatpush1.msra.mxu0 0.0
    %136 = vmatprep.subr.mxu0 0.0
    %137 = vmatpush1.msra.mxu0 0.0
    %138 = vmatprep.subr.mxu0 0.0
    %139 = vmatpush1.msra.mxu0 0.0
    %140 = vmatprep.subr.mxu0 0.0
    %141 = vmatpush1.msra.mxu0 0.0
    %142 = vmatprep.subr.mxu0 0.0
    %143 = vmatpush1.msra.mxu0 0.0
    %144 = vmatprep.subr.mxu0 0.0
    %145 = vmatpush1.msra.mxu0 0.0
    %146 = vmatprep.subr.mxu0 0.0
    %147 = vmatpush1.msra.mxu0 0.0
    %148 = vmatprep.subr.mxu0 0.0
    %149 = vmatpush1.msra.mxu0 0.0
    %150 = vmatprep.subr.mxu0 0.0
    %151 = vmatpush1.msra.mxu0 0.0
    %152 = vmatprep.subr.mxu0 0.0
    %153 = vmatpush1.msra.mxu0 0.0
    %154 = vmatprep.subr.mxu0 0.0
    %155 = vmatpush1.msra.mxu0 0.0
    %156 = vmatprep.subr.mxu0 0.0
    %157 = vmatpush1.msra.mxu0 0.0
    %158 = vmatprep.subr.mxu0 0.0
    %159 = vmatpush1.msra.mxu0 0.0
    %160 = vmatprep.subr.mxu0 0.0
    %161 = vmatpush1.msra.mxu0 0.0
    %162 = vmatprep.subr.mxu0 0.0
    %163 = vmatpush1.msra.mxu0 0.0
    %164 = vmatprep.subr.mxu0 0.0
    %165 = vmatpush1.msra.mxu0 0.0
    %166 = vmatprep.subr.mxu0 0.0
    %167 = vmatpush1.msra.mxu0 0.0
    %168 = vmatprep.subr.mxu0 0.0
    %169 = vmatpush1.msra.mxu0 0.0
    %170 = vmatprep.subr.mxu0 0.0
    %171 = vmatpush1.msra.mxu0 0.0
    %172 = vmatprep.subr.mxu0 0.0
    %173 = vmatpush1.msra.mxu0 0.0
    %174 = vmatprep.subr.mxu0 0.0
    %175 = vmatpush1.msra.mxu0 0.0
    %176 = vmatprep.subr.mxu0 0.0
    %177 = vmatpush1.msra.mxu0 0.0
    %178 = vmatprep.subr.mxu0 0.0
    %179 = vmatpush1.msra.mxu0 0.0
    %180 = vmatprep.subr.mxu0 0.0
    %181 = vmatpush1.msra.mxu0 0.0
    %182 = vmatprep.mubr.f32.mxu0 0.0
    %183 = vmatmul.mubr.f32.gmra.mrb[0].mxu0 %v116
    %v184 = vpop.f32.mrb[0].mxu0
    %v185 = vadd.f32 %v112, %v184
    %v186 = vpop.f32.mrb[0].mxu0
    %187 = vdwg.mxu0
    %vm188 = vcmp.ge.f32.partialorder %v185, 0.0
    %v189 = vmul.f32 %v185, 0.2
    %v190 = vsel %vm188, %v185, %v189
    %v191 = vld [vmem:[#allocation7] sm:$0xff]
    %v192 = vld [vmem:[#allocation7 + $0x8] sm:$0xff]
    %v193 = vld [vmem:[#allocation7 + $0x10] sm:$0xff]
    %v194 = vld [vmem:[#allocation7 + $0x18] sm:$0xff]
    %v195 = vld [vmem:[#allocation7 + $0x20] sm:$0xff]
    %v196 = vld [vmem:[#allocation7 + $0x28] sm:$0xff]
    %v197 = vld [vmem:[#allocation7 + $0x30] sm:$0xff]
    %v198 = vld [vmem:[#allocation7 + $0x38] sm:$0xff]
    %v199 = vld [vmem:[%s4] sm:$0x1]
    %v201 = vlaneseq
    %v202 = vshrl.u32 %v201, 7
    %v203 = vsub.s32 0, %v202
    %v204 = vrot.slane %v199, %v203
    %vm206 = vcmask 523264
    %v208 = vsel %vm206, %v190, 0
    %210 = vmatprep.subr.mxu0 0.0
    %211 = vmatpush1.msra.mxu0 %v191
    %212 = vmatprep.subr.mxu0 0.0
    %213 = vmatpush1.msra.mxu0 %v192
    %214 = vmatprep.subr.mxu0 0.0
    %215 = vmatpush1.msra.mxu0 %v193
    %216 = vmatprep.subr.mxu0 0.0
    %217 = vmatpush1.msra.mxu0 %v194
    %218 = vmatprep.subr.mxu0 0.0
    %219 = vmatpush1.msra.mxu0 %v195
    %220 = vmatprep.subr.mxu0 0.0
    %221 = vmatpush1.msra.mxu0 %v196
    %222 = vmatprep.subr.mxu0 0.0
    %223 = vmatpush1.msra.mxu0 %v197
    %224 = vmatprep.subr.mxu0 0.0
    %225 = vmatpush1.msra.mxu0 %v198
    %226 = vmatprep.subr.mxu0 0.0
    %227 = vmatpush1.msra.mxu0 0.0
    %228 = vmatprep.subr.mxu0 0.0
    %229 = vmatpush1.msra.mxu0 0.0
    %230 = vmatprep.subr.mxu0 0.0
    %231 = vmatpush1.msra.mxu0 0.0
    %232 = vmatprep.subr.mxu0 0.0
    %233 = vmatpush1.msra.mxu0 0.0
    %234 = vmatprep.subr.mxu0 0.0
    %235 = vmatpush1.msra.mxu0 0.0
    %236 = vmatprep.subr.mxu0 0.0
    %237 = vmatpush1.msra.mxu0 0.0
    %238 = vmatprep.subr.mxu0 0.0
    %239 = vmatpush1.msra.mxu0 0.0
    %240 = vmatprep.subr.mxu0 0.0
    %241 = vmatpush1.msra.mxu0 0.0
    %242 = vmatprep.subr.mxu0 0.0
    %243 = vmatpush1.msra.mxu0 0.0
    %244 = vmatprep.subr.mxu0 0.0
    %245 = vmatpush1.msra.mxu0 0.0
    %246 = vmatprep.subr.mxu0 0.0
    %247 = vmatpush1.msra.mxu0 0.0
    %248 = vmatprep.subr.mxu0 0.0
    %249 = vmatpush1.msra.mxu0 0.0
    %250 = vmatprep.subr.mxu0 0.0
    %251 = vmatpush1.msra.mxu0 0.0
    %252 = vmatprep.subr.mxu0 0.0
    %253 = vmatpush1.msra.mxu0 0.0
    %254 = vmatprep.subr.mxu0 0.0
    %255 = vmatpush1.msra.mxu0 0.0
    %256 = vmatprep.subr.mxu0 0.0
    %257 = vmatpush1.msra.mxu0 0.0
    %258 = vmatprep.subr.mxu0 0.0
    %259 = vmatpush1.msra.mxu0 0.0
    %260 = vmatprep.subr.mxu0 0.0
    %261 = vmatpush1.msra.mxu0 0.0
    %262 = vmatprep.subr.mxu0 0.0
    %263 = vmatpush1.msra.mxu0 0.0
    %264 = vmatprep.subr.mxu0 0.0
    %265 = vmatpush1.msra.mxu0 0.0
    %266 = vmatprep.subr.mxu0 0.0
    %267 = vmatpush1.msra.mxu0 0.0
    %268 = vmatprep.subr.mxu0 0.0
    %269 = vmatpush1.msra.mxu0 0.0
    %270 = vmatprep.subr.mxu0 0.0
    %271 = vmatpush1.msra.mxu0 0.0
    %272 = vmatprep.subr.mxu0 0.0
    %273 = vmatpush1.msra.mxu0 0.0
    %274 = vmatprep.mubr.f32.mxu0 0.0
    %275 = vmatmul.mubr.f32.gmra.mrb[0].mxu0 %v208
    %v276 = vpop.f32.mrb[0].mxu0
    %v277 = vadd.f32 %v204, %v276
    %v278 = vpop.f32.mrb[0].mxu0
    %279 = vdwg.mxu0
    %vm280 = vcmp.ge.f32.partialorder %v277, 0.0
    %v281 = vmul.f32 %v277, 0.2
    %v282 = vsel %vm280, %v277, %v281
    %v283 = vld [vmem:[#allocation8] sm:$0xff]
    %v284 = vld [vmem:[#allocation8 + $0x8] sm:$0xff]
    %v285 = vld [vmem:[#allocation8 + $0x10] sm:$0xff]
    %v286 = vld [vmem:[#allocation8 + $0x18] sm:$0xff]
    %v287 = vld [vmem:[#allocation8 + $0x20] sm:$0xff]
    %v288 = vld [vmem:[#allocation8 + $0x28] sm:$0xff]
    %v289 = vld [vmem:[#allocation8 + $0x30] sm:$0xff]
    %v290 = vld [vmem:[#allocation8 + $0x38] sm:$0xff]
    %v291 = vld [vmem:[%s6] sm:$0x1]
    %v293 = vlaneseq
    %v294 = vshrl.u32 %v293, 7
    %v295 = vsub.s32 0, %v294
    %v296 = vrot.slane %v291, %v295
    %v299 = vsel %vm206, %v282, 0
    %301 = vmatprep.subr.mxu0 0.0
    %302 = vmatpush1.msra.mxu0 %v283
    %303 = vmatprep.subr.mxu0 0.0
    %304 = vmatpush1.msra.mxu0 %v284
    %305 = vmatprep.subr.mxu0 0.0
    %306 = vmatpush1.msra.mxu0 %v285
    %307 = vmatprep.subr.mxu0 0.0
    %308 = vmatpush1.msra.mxu0 %v286
    %309 = vmatprep.subr.mxu0 0.0
    %310 = vmatpush1.msra.mxu0 %v287
    %311 = vmatprep.subr.mxu0 0.0
    %312 = vmatpush1.msra.mxu0 %v288
    %313 = vmatprep.subr.mxu0 0.0
    %314 = vmatpush1.msra.mxu0 %v289
    %315 = vmatprep.subr.mxu0 0.0
    %316 = vmatpush1.msra.mxu0 %v290
    %317 = vmatprep.subr.mxu0 0.0
    %318 = vmatpush1.msra.mxu0 0.0
    %319 = vmatprep.subr.mxu0 0.0
    %320 = vmatpush1.msra.mxu0 0.0
    %321 = vmatprep.subr.mxu0 0.0
    %322 = vmatpush1.msra.mxu0 0.0
    %323 = vmatprep.subr.mxu0 0.0
    %324 = vmatpush1.msra.mxu0 0.0
    %325 = vmatprep.subr.mxu0 0.0
    %326 = vmatpush1.msra.mxu0 0.0
    %327 = vmatprep.subr.mxu0 0.0
    %328 = vmatpush1.msra.mxu0 0.0
    %329 = vmatprep.subr.mxu0 0.0
    %330 = vmatpush1.msra.mxu0 0.0
    %331 = vmatprep.subr.mxu0 0.0
    %332 = vmatpush1.msra.mxu0 0.0
    %333 = vmatprep.subr.mxu0 0.0
    %334 = vmatpush1.msra.mxu0 0.0
    %335 = vmatprep.subr.mxu0 0.0
    %336 = vmatpush1.msra.mxu0 0.0
    %337 = vmatprep.subr.mxu0 0.0
    %338 = vmatpush1.msra.mxu0 0.0
    %339 = vmatprep.subr.mxu0 0.0
    %340 = vmatpush1.msra.mxu0 0.0
    %341 = vmatprep.subr.mxu0 0.0
    %342 = vmatpush1.msra.mxu0 0.0
    %343 = vmatprep.subr.mxu0 0.0
    %344 = vmatpush1.msra.mxu0 0.0
    %345 = vmatprep.subr.mxu0 0.0
    %346 = vmatpush1.msra.mxu0 0.0
    %347 = vmatprep.subr.mxu0 0.0
    %348 = vmatpush1.msra.mxu0 0.0
    %349 = vmatprep.subr.mxu0 0.0
    %350 = vmatpush1.msra.mxu0 0.0
    %351 = vmatprep.subr.mxu0 0.0
    %352 = vmatpush1.msra.mxu0 0.0
    %353 = vmatprep.subr.mxu0 0.0
    %354 = vmatpush1.msra.mxu0 0.0
    %355 = vmatprep.subr.mxu0 0.0
    %356 = vmatpush1.msra.mxu0 0.0
    %357 = vmatprep.subr.mxu0 0.0
    %358 = vmatpush1.msra.mxu0 0.0
    %359 = vmatprep.subr.mxu0 0.0
    %360 = vmatpush1.msra.mxu0 0.0
    %361 = vmatprep.subr.mxu0 0.0
    %362 = vmatpush1.msra.mxu0 0.0
    %363 = vmatprep.subr.mxu0 0.0
    %364 = vmatpush1.msra.mxu0 0.0
    %365 = vmatprep.mubr.f32.mxu0 0.0
    %366 = vmatmul.mubr.f32.gmra.mrb[0].mxu0 %v299
    %v367 = vpop.f32.mrb[0].mxu0
    %v368 = vadd.f32 %v296, %v367
    %v369 = vpop.f32.mrb[0].mxu0
    %370 = vdwg.mxu0
    %vm371 = vcmp.ge.f32.partialorder %v368, 0.0
    %v372 = vmul.f32 %v368, 0.2
    %v373 = vsel %vm371, %v368, %v372
    %v374 = vld [vmem:[#allocation10] sm:$0xff]
    %v375 = vld [vmem:[#allocation10 + $0x8] sm:$0xff]
    %v376 = vld [vmem:[#allocation10 + $0x10] sm:$0xff]
    %v377 = vld [vmem:[#allocation10 + $0x18] sm:$0xff]
    %v378 = vld [vmem:[#allocation10 + $0x20] sm:$0xff]
    %v379 = vld [vmem:[#allocation10 + $0x28] sm:$0xff]
    %v380 = vld [vmem:[#allocation10 + $0x30] sm:$0xff]
    %v381 = vld [vmem:[#allocation10 + $0x38] sm:$0xff]
    %v382 = vld [vmem:[%s8] sm:$0x1]
    %v384 = vlaneseq
    %v385 = vshrl.u32 %v384, 7
    %v386 = vsub.s32 0, %v385
    %v387 = vrot.slane %v382, %v386
    %v390 = vsel %vm206, %v373, 0
    %392 = vmatprep.subr.mxu0 0.0
    %393 = vmatpush1.msra.mxu0 %v374
    %394 = vmatprep.subr.mxu0 0.0
    %395 = vmatpush1.msra.mxu0 %v375
    %396 = vmatprep.subr.mxu0 0.0
    %397 = vmatpush1.msra.mxu0 %v376
    %398 = vmatprep.subr.mxu0 0.0
    %399 = vmatpush1.msra.mxu0 %v377
    %400 = vmatprep.subr.mxu0 0.0
    %401 = vmatpush1.msra.mxu0 %v378
    %402 = vmatprep.subr.mxu0 0.0
    %403 = vmatpush1.msra.mxu0 %v379
    %404 = vmatprep.subr.mxu0 0.0
    %405 = vmatpush1.msra.mxu0 %v380
    %406 = vmatprep.subr.mxu0 0.0
    %407 = vmatpush1.msra.mxu0 %v381
    %408 = vmatprep.subr.mxu0 0.0
    %409 = vmatpush1.msra.mxu0 0.0
    %410 = vmatprep.subr.mxu0 0.0
    %411 = vmatpush1.msra.mxu0 0.0
    %412 = vmatprep.subr.mxu0 0.0
    %413 = vmatpush1.msra.mxu0 0.0
    %414 = vmatprep.subr.mxu0 0.0
    %415 = vmatpush1.msra.mxu0 0.0
    %416 = vmatprep.subr.mxu0 0.0
    %417 = vmatpush1.msra.mxu0 0.0
    %418 = vmatprep.subr.mxu0 0.0
    %419 = vmatpush1.msra.mxu0 0.0
    %420 = vmatprep.subr.mxu0 0.0
    %421 = vmatpush1.msra.mxu0 0.0
    %422 = vmatprep.subr.mxu0 0.0
    %423 = vmatpush1.msra.mxu0 0.0
    %424 = vmatprep.subr.mxu0 0.0
    %425 = vmatpush1.msra.mxu0 0.0
    %426 = vmatprep.subr.mxu0 0.0
    %427 = vmatpush1.msra.mxu0 0.0
    %428 = vmatprep.subr.mxu0 0.0
    %429 = vmatpush1.msra.mxu0 0.0
    %430 = vmatprep.subr.mxu0 0.0
    %431 = vmatpush1.msra.mxu0 0.0
    %432 = vmatprep.subr.mxu0 0.0
    %433 = vmatpush1.msra.mxu0 0.0
    %434 = vmatprep.subr.mxu0 0.0
    %435 = vmatpush1.msra.mxu0 0.0
    %436 = vmatprep.subr.mxu0 0.0
    %437 = vmatpush1.msra.mxu0 0.0
    %438 = vmatprep.subr.mxu0 0.0
    %439 = vmatpush1.msra.mxu0 0.0
    %440 = vmatprep.subr.mxu0 0.0
    %441 = vmatpush1.msra.mxu0 0.0
    %442 = vmatprep.subr.mxu0 0.0
    %443 = vmatpush1.msra.mxu0 0.0
    %444 = vmatprep.subr.mxu0 0.0
    %445 = vmatpush1.msra.mxu0 0.0
    %446 = vmatprep.subr.mxu0 0.0
    %447 = vmatpush1.msra.mxu0 0.0
    %448 = vmatprep.subr.mxu0 0.0
    %449 = vmatpush1.msra.mxu0 0.0
    %450 = vmatprep.subr.mxu0 0.0
    %451 = vmatpush1.msra.mxu0 0.0
    %452 = vmatprep.subr.mxu0 0.0
    %453 = vmatpush1.msra.mxu0 0.0
    %454 = vmatprep.subr.mxu0 0.0
    %455 = vmatpush1.msra.mxu0 0.0
    %456 = vmatprep.mubr.f32.mxu0 0.0
    %457 = vmatmul.mubr.f32.gmra.mrb[0].mxu0 %v390
    %v458 = vpop.f32.mrb[0].mxu0
    %v459 = vadd.f32 %v387, %v458
    %v460 = vpop.f32.mrb[0].mxu0
    %461 = vdwg.mxu0
    %462 = vst.msk [vmem:[#allocation11] sm:$0xff] %vm114, %v459
    %464 = vrot.lane.b32.xlu0 %v459, 96
    %v465 = vpop.permute.xlu0 %464
    %467 = vst.msk [vmem:[#allocation12] sm:$0xff] %vm114, %v465
    // Predicated region
    $region58: #{tpu_custom_call.1} parent=1 // pred_check
      _
    $region59: #{tpu_custom_call.1} parent=1 // pred_check_branch
      %469 = sbr.rel (0) target = $region61
    $region60: #{tpu_custom_call.1} parent=1 // pred_region
      %s471 = ssub.s32 128, 128
      %472 = vsyncadd [#allocation4], %s471
      %s474 = sshll.u32 [#allocation11], 4
      %s475 = int_to_ptr.vmem [resolvable:$true] %s474
      %477 = dma.vmem_to_hbm [thread:$0]  %s475, 128, %s9, [#allocation4]
    $region61: #{tpu_custom_call.1} parent=1 // pred_fallthru
      _
    // Predicated region
    $region62: #{tpu_custom_call.1} parent=1 // pred_check
      _
    $region63: #{tpu_custom_call.1} parent=1 // pred_check_branch
      %479 = sbr.rel (0) target = $region65
    $region64: #{tpu_custom_call.1} parent=1 // pred_region
      %s481 = ssub.s32 128, 128
      %482 = vsyncadd [#allocation13], %s481
      %s484 = sshll.u32 [#allocation12], 4
      %s485 = int_to_ptr.vmem [resolvable:$true] %s484
      %487 = dma.vmem_to_hbm [thread:$0]  %s485, 128, %s10, [#allocation13]
    $region65: #{tpu_custom_call.1} parent=1 // pred_fallthru
      _
    // Predicated region
    $region66: #{tpu_custom_call.1} parent=1 // pred_check
      _
    $region67: #{tpu_custom_call.1} parent=1 // pred_check_branch
      %489 = sbr.rel (0) target = $region69
    $region68: #{tpu_custom_call.1} parent=1 // pred_region
      %490 = dma.done [#allocation4], 128
    $region69: #{tpu_custom_call.1} parent=1 // pred_fallthru
      _
    // Predicated region
    $region70: #{tpu_custom_call.1} parent=1 // pred_check
      _
    $region71: #{tpu_custom_call.1} parent=1 // pred_check_branch
      %492 = sbr.rel (0) target = $region73
    $region72: #{tpu_custom_call.1} parent=1 // pred_region
      %493 = dma.done [#allocation13], 128
    $region73: #{tpu_custom_call.1} parent=1 // pred_fallthru
      _
    %494 = vsyncpa [#allocation3], 1
    %495 = vsyncpa [#allocation6], 1
    %496 = vsyncpa [#allocation9], 1
    %497 = vsyncpa [#allocation4], 1
    %498 = vsyncpa [#allocation13], 1

</llo_original>
